<compile_context>
chip_gen: v7x
topology: tpu7x:2x2x1
jax: 0.10.0
libtpu: 0.0.40
codegen_flags: <defaults>
</compile_context>

<pallas_src>
import jax
import jax.numpy as jnp
from jax.experimental import pallas as pl
from jax.experimental.pallas import tpu as pltpu


def _actnorm_kernel(x_ref, loc_ref, scale_ref, o_ref):
    # x_ref / o_ref: (n_blk, t_lane) in the input dtype.
    # loc_ref / scale_ref: (1, t_lane) float32, broadcast over sublanes.
    x = x_ref[...]
    o_ref[...] = (scale_ref[...] * (x + loc_ref[...])).astype(o_ref.dtype)


def _round_up(x, m):
    return ((x + m - 1) // m) * m


def _sublane_multiple(dtype):
    # Packed sublane tile height: 8 rows for 4-byte, 16 for 2-byte, 32 for 1-byte.
    return {4: 8, 2: 16, 1: 32}.get(jnp.dtype(dtype).itemsize, 8)


def _pick_tiles(N, T, itemsize, sub, target_bytes):
    """Choose (n_blk, t_lane) for an (N, T) elementwise pass.

    Preference order: keep t_lane = T (fully contiguous DMAs, params fetched
    once and resident) and tile along the batch/sublane axis; only split the
    lane axis when even `sub` rows of full width exceed the block budget.
    The budget accounts for the 8x sublane padding of the (1, t_lane) f32
    param blocks, and n_blk is capped so the grid has >= 2 blocks along N
    whenever N is large enough (v7x has two TensorCores).
    """
    def param_vmem(t):        # 2 params x 2 buffers x 8-sublane-padded f32
        return 2 * 2 * 8 * t * 4

    t_lane = T
    if T % 128 == 0:
        # Shrink lanes (128-aligned divisors of T) until `sub` rows of x plus
        # a share of the padded params fit the per-block budget.
        while (t_lane % 256 == 0
               and sub * t_lane * itemsize + param_vmem(t_lane) // 4 > target_bytes):
            t_lane //= 2

    # Largest row count (multiple of sub) whose x-block stays within budget.
    rows_fit = max(sub, (target_bytes // max(1, t_lane * itemsize)) // sub * sub)

    n_padded = _round_up(N, sub)
    if n_padded >= 2 * sub:
        rows_cap = max(sub, (n_padded // 2) // sub * sub)   # >= 2 blocks along N
    else:
        rows_cap = n_padded

    n_blk = min(rows_fit, rows_cap, n_padded)
    n_blk = max(sub, (n_blk // sub) * sub)
    return n_blk, t_lane


def actnorm_forward(x, loc, scale, logdet=False,
                    block_target_bytes=2 * 1024 * 1024):
    """ActNorm forward. x: (N, C, H, W) or (N, C); loc/scale: (1, C, 1, 1)."""
    if x.ndim == 2:
        # Squeeze branch (H = W = 1): lane-width C is too small for a useful
        # Pallas pass; plain XLA fusion wins here.
        N, C = x.shape
        H = W = 1
        h = (scale.reshape(1, C).astype(jnp.float32)
             * (x.astype(jnp.float32) + loc.reshape(1, C).astype(jnp.float32))
             ).astype(x.dtype)
    else:
        N, C, H, W = x.shape
        HW = H * W
        T = C * HW
        itemsize = jnp.dtype(x.dtype).itemsize
        sub = _sublane_multiple(x.dtype)

        x2 = x.reshape(N, T)
        scale_row = jnp.repeat(
            scale.reshape(C).astype(jnp.float32), HW).reshape(1, T)
        loc_row = jnp.repeat(
            loc.reshape(C).astype(jnp.float32), HW).reshape(1, T)

        n_blk, t_lane = _pick_tiles(N, T, itemsize, sub, block_target_bytes)

        # Pad the batch axis to a multiple of n_blk (ragged N never falls back
        # to a single full-extent batch block); padded rows are sliced off.
        Np = _round_up(N, n_blk)
        if Np != N:
            x2 = jnp.pad(x2, ((0, Np - N), (0, 0)))

        # Grid ordered (lane_blocks, n_blocks): the batch axis is innermost, so
        # the param block index (0, j) is constant across consecutive steps and
        # loc/scale are not re-DMA'd every iteration. When t_lane == T the
        # params are fetched exactly once and stay resident.
        grid = (T // t_lane, Np // n_blk)

        cost = pl.CostEstimate(
            flops=2 * N * T,
            transcendentals=0,
            bytes_accessed=2 * N * T * itemsize + 2 * T * 4,
        )

        # Explicit scoped-VMEM limit: streaming in/out double buffers plus the
        # 8x sublane-padded param buffers, with headroom; never exceeds v7x's
        # 64 MiB physical VMEM with the default 2 MiB block target.
        vmem_need = (2 * 2 * n_blk * t_lane * itemsize      # x + out, 2 bufs each
                     + 2 * 2 * 8 * t_lane * 4)              # padded params
        vmem_limit = int(min(max(2 * vmem_need, 16 * 1024 * 1024),
                             64 * 1024 * 1024))

        out = pl.pallas_call(
            _actnorm_kernel,
            out_shape=jax.ShapeDtypeStruct((Np, T), x.dtype),
            grid_spec=pltpu.PrefetchScalarGridSpec(
                num_scalar_prefetch=0,
                grid=grid,
                in_specs=[
                    pl.BlockSpec((n_blk, t_lane), lambda j, i: (i, j)),
                    pl.BlockSpec((1, t_lane), lambda j, i: (0, j)),
                    pl.BlockSpec((1, t_lane), lambda j, i: (0, j)),
                ],
                out_specs=pl.BlockSpec((n_blk, t_lane), lambda j, i: (i, j)),
            ),
            compiler_params=pltpu.CompilerParams(
                dimension_semantics=("parallel", "parallel"),
                vmem_limit_bytes=vmem_limit),
            cost_estimate=cost,
        )(x2, loc_row, scale_row)

        h = out[:N].reshape(N, C, H, W)

    if logdet:
        # C-element reduction over parameters: plain XLA, kept in float32
        # (matches PyTorch promotion of the f32 parameters).
        ld_scalar = (H * W) * jnp.sum(jnp.log(jnp.abs(scale.astype(jnp.float32))))
        ld = ld_scalar * jnp.ones((N,), dtype=jnp.float32)
        return h, ld
    return h


if __name__ == "__main__":
    key = jax.random.PRNGKey(0)
    k_x, k_loc, k_scale, k_x2, k_x3 = jax.random.split(key, 5)

    N, C, H, W = 2, 4, 16, 16
    x = jax.random.normal(k_x, (N, C, H, W), dtype=jnp.float32)

    # Module __init__ uses loc=zeros, scale=ones; perturb deterministically so
    # the kernel math is exercised non-trivially.
    loc = 0.1 * jax.random.normal(k_loc, (1, C, 1, 1), dtype=jnp.float32)
    scale = 1.0 + 0.1 * jax.random.normal(k_scale, (1, C, 1, 1), dtype=jnp.float32)

    h_ref = scale * (x + loc)
    ld_ref = H * W * jnp.sum(jnp.log(jnp.abs(scale))) * jnp.ones((N,), jnp.float32)

    # --- 4-D path with logdet ---
    h, ld = actnorm_forward(x, loc, scale, logdet=True)
    h = jax.block_until_ready(h)
    ld = jax.block_until_ready(ld)
    assert h.shape == (N, C, H, W) and h.dtype == x.dtype
    assert ld.shape == (N,) and ld.dtype == jnp.float32
    assert jnp.allclose(h, h_ref, atol=1e-5, rtol=1e-5)
    assert jnp.allclose(ld, ld_ref, atol=1e-4, rtol=1e-5)

    # --- tiny block budget: exercises multi-step lane tiling with params
    #     resident across the (inner) batch loop ---
    h_tiled = jax.block_until_ready(
        actnorm_forward(x, loc, scale, logdet=False, block_target_bytes=2048))
    assert jnp.allclose(h_tiled, h_ref, atol=1e-5, rtol=1e-5)

    # --- N not divisible by the sublane multiple: exercises batch padding ---
    N3 = 3
    x3 = jax.random.normal(k_x3, (N3, C, 8, 8), dtype=jnp.float32)
    h3 = jax.block_until_ready(actnorm_forward(x3, loc, scale, logdet=False))
    h3_ref = scale * (x3 + loc)
    assert h3.shape == (N3, C, 8, 8)
    assert jnp.allclose(h3, h3_ref, atol=1e-5, rtol=1e-5)

    # --- bf16 input: exercises the 16-row packed sublane multiple ---
    xb = x.astype(jnp.bfloat16)
    hb = jax.block_until_ready(actnorm_forward(xb, loc, scale, logdet=False))
    assert hb.dtype == jnp.bfloat16 and hb.shape == (N, C, H, W)
    assert jnp.allclose(hb.astype(jnp.float32), h_ref, atol=3e-2, rtol=3e-2)

    # --- 2-D path (squeeze branch), logdet=False ---
    x2 = jax.random.normal(k_x2, (N, C), dtype=jnp.float32)
    h2 = jax.block_until_ready(actnorm_forward(x2, loc, scale, logdet=False))
    h2_ref = (scale * (x2[:, :, None, None] + loc))[:, :, 0, 0]
    assert h2.shape == (N, C)
    assert jnp.allclose(h2, h2_ref, atol=1e-5, rtol=1e-5)

    # TODO(synk): data-dependent `initialize()` (training-time first-batch
    # mean/std buffer update) and the `reverse` path are stateful module logic,
    # not part of the steady-state forward hot path.
    print("KERNEL_OK")
</pallas_src>

<mosaic_0001>
module attributes {stable_mosaic.version = 11 : i64} {
  func.func @_actnorm_kernel(%arg0: i32, %arg1: i32, %arg2: memref<8x1024xf32, #tpu.memory_space<vmem>>, %arg3: memref<1x1024xf32, #tpu.memory_space<vmem>>, %arg4: memref<1x1024xf32, #tpu.memory_space<vmem>>, %arg5: memref<8x1024xf32, #tpu.memory_space<vmem>>) attributes {dimension_semantics = [#tpu.dimension_semantics<parallel>, #tpu.dimension_semantics<parallel>], iteration_bounds = array<i64: 1, 1>, scalar_prefetch = 0 : i64, scratch_operands = 0 : i64, tpu.core_type = #tpu.core_type<tc>, window_params = [{transform_indices = @transform_0, window_bounds = array<i64: 8, 1024>}, {transform_indices = @transform_1, window_bounds = array<i64: 1, 1024>}, {transform_indices = @transform_2, window_bounds = array<i64: 1, 1024>}, {transform_indices = @transform_3, window_bounds = array<i64: 8, 1024>}]} {
    %c0 = arith.constant 0 : index
    %c0_0 = arith.constant 0 : index
    %0 = vector.load %arg2[%c0, %c0_0] : memref<8x1024xf32, #tpu.memory_space<vmem>>, vector<8x1024xf32>
    %c0_1 = arith.constant 0 : index
    %c0_2 = arith.constant 0 : index
    %1 = vector.load %arg4[%c0_1, %c0_2] : memref<1x1024xf32, #tpu.memory_space<vmem>>, vector<1x1024xf32>
    %c0_3 = arith.constant 0 : index
    %c0_4 = arith.constant 0 : index
    %2 = vector.load %arg3[%c0_3, %c0_4] : memref<1x1024xf32, #tpu.memory_space<vmem>>, vector<1x1024xf32>
    %3 = vector.broadcast %2 : vector<1x1024xf32> to vector<8x1024xf32>
    %4 = arith.addf %0, %3 : vector<8x1024xf32>
    %5 = vector.broadcast %1 : vector<1x1024xf32> to vector<8x1024xf32>
    %6 = arith.mulf %5, %4 : vector<8x1024xf32>
    %c0_5 = arith.constant 0 : index
    %c0_6 = arith.constant 0 : index
    %7 = vector.load %arg5[%c0_5, %c0_6] : memref<8x1024xf32, #tpu.memory_space<vmem>>, vector<8x1024xf32>
    tpu.vector_store %arg5[%c0_5, %c0_6], %6 {strides = array<i32>} : memref<8x1024xf32, #tpu.memory_space<vmem>>, vector<8x1024xf32>,
    return
  }
  func.func @transform_0(%arg0: i32, %arg1: i32) -> (i32, i32) {
    %c0_i32 = arith.constant 0 : i32
    return %arg1, %arg0 : i32, i32
  }
  func.func @transform_1(%arg0: i32, %arg1: i32) -> (i32, i32) {
    %c0_i32 = arith.constant 0 : i32
    %c0_i32_0 = arith.constant 0 : i32
    return %c0_i32, %arg0 : i32, i32
  }
  func.func @transform_2(%arg0: i32, %arg1: i32) -> (i32, i32) {
    %c0_i32 = arith.constant 0 : i32
    %c0_i32_0 = arith.constant 0 : i32
    return %c0_i32, %arg0 : i32, i32
  }
  func.func @transform_3(%arg0: i32, %arg1: i32) -> (i32, i32) {
    %c0_i32 = arith.constant 0 : i32
    return %arg1, %arg0 : i32, i32
  }
}

</mosaic_0001>

<llo_original>
// kernel: tpu_custom_call.1
$region0: #{tpu_custom_call.1}
  #allocation0 [shape = 'u32[]', space=smem, size = 0x4, offset = 0x4, fixed_abs, tag = 'smem constant byte address 0x4 - core index']
  #allocation1 [shape = 'u32[144,128]{1,0:T(1,128)}', space=vmem, size = 0x12000, scoped, tag = 'internal scratch']
  %s0 = inlined_call_operand.hbm [shape: f32[8,1024], index: 0, kind: input, shape index: {}]
  %s1 = inlined_call_operand.hbm [shape: f32[1,1024], index: 1, kind: input, shape index: {}]
  %s2 = inlined_call_operand.hbm [shape: f32[1,1024], index: 2, kind: input, shape index: {}]
  %s3 = inlined_call_operand.hbm [shape: f32[8,1024], index: 3, kind: output, shape index: {}]
  %s4 = sld [smem:[#allocation0]]
  $region34: #{tpu_custom_call.1} parent=0
    _
  %s6 = ssub.s32 1, %s4
  %s7 = scalar_select 0, %s6, %s4
  $region1: #{tpu_custom_call.1} parent=0
    #allocation2 [shape = 'u8[32768]{0}', space=vmem, size = 0x8000, scoped, tag = 'input window, operand 0, single buffered']
    #allocation3 [shape = 's32[1]{0}', space=sflag, size = 0x4, scoped, tag = 'scoped memory for tpu_custom_call.1']
    #allocation4 [shape = 's32[1]{0}', space=sflag, size = 0x4, scoped, tag = 'scoped memory for tpu_custom_call.1']
    #allocation5 [shape = 'u8[4096]{0}', space=vmem, size = 0x1000, scoped, tag = 'input window, operand 1, single buffered']
    #allocation6 [shape = 's32[1]{0}', space=sflag, size = 0x4, scoped, tag = 'scoped memory for tpu_custom_call.1']
    #allocation7 [shape = 'u8[4096]{0}', space=vmem, size = 0x1000, scoped, tag = 'input window, operand 2, single buffered']
    #allocation8 [shape = 'u8[32768]{0}', space=vmem, size = 0x8000, scoped, tag = 'output window, operand 0, single buffered']
    %8 = vsyncpa [#allocation3], 0
    %9 = vsyncpa [#allocation6], 0
    %10 = vsyncpa [#allocation4], 0
    // Predicated region
    $region2: #{tpu_custom_call.1} parent=1 // pred_check
      _
    $region3: #{tpu_custom_call.1} parent=1 // pred_check_branch
      %12 = sbr.rel (0) target = $region5
    $region4: #{tpu_custom_call.1} parent=1 // pred_region
      %s14 = ssub.s32 1024, 1024
      %15 = vsyncadd [#allocation3], %s14
      %s17 = sshll.u32 [#allocation2], 4
      %s18 = int_to_ptr.vmem [resolvable:$true] %s17
      %20 = dma.hbm_to_vmem [thread:$0]  %s0, 1024, %s18, [#allocation3]
    $region5: #{tpu_custom_call.1} parent=1 // pred_fallthru
      _
    // Predicated region
    $region6: #{tpu_custom_call.1} parent=1 // pred_check
      _
    $region7: #{tpu_custom_call.1} parent=1 // pred_check_branch
      %22 = sbr.rel (0) target = $region9
    $region8: #{tpu_custom_call.1} parent=1 // pred_region
      %s24 = ssub.s32 128, 128
      %25 = vsyncadd [#allocation6], %s24
      %s27 = sshll.u32 [#allocation5], 4
      %s28 = int_to_ptr.vmem [resolvable:$true] %s27
      %30 = dma.hbm_to_vmem [thread:$0]  %s1, 128, %s28, [#allocation6]
    $region9: #{tpu_custom_call.1} parent=1 // pred_fallthru
      _
    // Predicated region
    $region10: #{tpu_custom_call.1} parent=1 // pred_check
      _
    $region11: #{tpu_custom_call.1} parent=1 // pred_check_branch
      %32 = sbr.rel (0) target = $region13
    $region12: #{tpu_custom_call.1} parent=1 // pred_region
      %s34 = ssub.s32 128, 128
      %35 = vsyncadd [#allocation6], %s34
      %s37 = sshll.u32 [#allocation7], 4
      %s38 = int_to_ptr.vmem [resolvable:$true] %s37
      %40 = dma.hbm_to_vmem [thread:$0]  %s2, 128, %s38, [#allocation6]
    $region13: #{tpu_custom_call.1} parent=1 // pred_fallthru
      _
    // Predicated region
    $region14: #{tpu_custom_call.1} parent=1 // pred_check
      _
    $region15: #{tpu_custom_call.1} parent=1 // pred_check_branch
      %42 = sbr.rel (0) target = $region17
    $region16: #{tpu_custom_call.1} parent=1 // pred_region
      %43 = dma.done [#allocation3], 1024
    $region17: #{tpu_custom_call.1} parent=1 // pred_fallthru
      _
    // Predicated region
    $region18: #{tpu_custom_call.1} parent=1 // pred_check
      _
    $region19: #{tpu_custom_call.1} parent=1 // pred_check_branch
      %45 = sbr.rel (0) target = $region21
    $region20: #{tpu_custom_call.1} parent=1 // pred_region
      %46 = dma.done [#allocation6], 128
    $region21: #{tpu_custom_call.1} parent=1 // pred_fallthru
      _
    // Predicated region
    $region22: #{tpu_custom_call.1} parent=1 // pred_check
      _
    $region23: #{tpu_custom_call.1} parent=1 // pred_check_branch
      %48 = sbr.rel (0) target = $region25
    $region24: #{tpu_custom_call.1} parent=1 // pred_region
      %49 = dma.done [#allocation6], 128
    $region25: #{tpu_custom_call.1} parent=1 // pred_fallthru
      _
    %v50 = vld [vmem:[#allocation2] sm:$0xff]
    %v51 = vld [vmem:[#allocation2 + $0x8] sm:$0xff]
    %v52 = vld [vmem:[#allocation2 + $0x10] sm:$0xff]
    %v53 = vld [vmem:[#allocation2 + $0x18] sm:$0xff]
    %v54 = vld [vmem:[#allocation2 + $0x20] sm:$0xff]
    %v55 = vld [vmem:[#allocation2 + $0x28] sm:$0xff]
    %v56 = vld [vmem:[#allocation2 + $0x30] sm:$0xff]
    %v57 = vld [vmem:[#allocation2 + $0x38] sm:$0xff]
    %v58 = vld [vmem:[#allocation7] sm:$0xff]
    %v59 = vld [vmem:[#allocation5] sm:$0xff]
    %v61 = vlaneseq
    %v62 = vshrl.u32 %v61, 7
    %v63 = vsub.s32 0, %v62
    %v64 = vrot.slane %v59, %v63
    %v65 = vlaneseq
    %v66 = vshrl.u32 %v65, 7
    %v67 = vsub.s32 1, %v66
    %v68 = vrot.slane %v59, %v67
    %v69 = vlaneseq
    %v70 = vshrl.u32 %v69, 7
    %v71 = vsub.s32 2, %v70
    %v72 = vrot.slane %v59, %v71
    %v73 = vlaneseq
    %v74 = vshrl.u32 %v73, 7
    %v75 = vsub.s32 3, %v74
    %v76 = vrot.slane %v59, %v75
    %v77 = vlaneseq
    %v78 = vshrl.u32 %v77, 7
    %v79 = vsub.s32 4, %v78
    %v80 = vrot.slane %v59, %v79
    %v81 = vlaneseq
    %v82 = vshrl.u32 %v81, 7
    %v83 = vsub.s32 5, %v82
    %v84 = vrot.slane %v59, %v83
    %v85 = vlaneseq
    %v86 = vshrl.u32 %v85, 7
    %v87 = vsub.s32 6, %v86
    %v88 = vrot.slane %v59, %v87
    %v89 = vlaneseq
    %v90 = vshrl.u32 %v89, 7
    %v91 = vsub.s32 7, %v90
    %v92 = vrot.slane %v59, %v91
    %v101 = vadd.f32 %v50, %v64
    %v102 = vadd.f32 %v51, %v68
    %v103 = vadd.f32 %v52, %v72
    %v104 = vadd.f32 %v53, %v76
    %v105 = vadd.f32 %v54, %v80
    %v106 = vadd.f32 %v55, %v84
    %v107 = vadd.f32 %v56, %v88
    %v108 = vadd.f32 %v57, %v92
    %v110 = vlaneseq
    %v111 = vshrl.u32 %v110, 7
    %v112 = vsub.s32 0, %v111
    %v113 = vrot.slane %v58, %v112
    %v114 = vlaneseq
    %v115 = vshrl.u32 %v114, 7
    %v116 = vsub.s32 1, %v115
    %v117 = vrot.slane %v58, %v116
    %v118 = vlaneseq
    %v119 = vshrl.u32 %v118, 7
    %v120 = vsub.s32 2, %v119
    %v121 = vrot.slane %v58, %v120
    %v122 = vlaneseq
    %v123 = vshrl.u32 %v122, 7
    %v124 = vsub.s32 3, %v123
    %v125 = vrot.slane %v58, %v124
    %v126 = vlaneseq
    %v127 = vshrl.u32 %v126, 7
    %v128 = vsub.s32 4, %v127
    %v129 = vrot.slane %v58, %v128
    %v130 = vlaneseq
    %v131 = vshrl.u32 %v130, 7
    %v132 = vsub.s32 5, %v131
    %v133 = vrot.slane %v58, %v132
    %v134 = vlaneseq
    %v135 = vshrl.u32 %v134, 7
    %v136 = vsub.s32 6, %v135
    %v137 = vrot.slane %v58, %v136
    %v138 = vlaneseq
    %v139 = vshrl.u32 %v138, 7
    %v140 = vsub.s32 7, %v139
    %v141 = vrot.slane %v58, %v140
    %v150 = vmul.f32 %v113, %v101
    %v151 = vmul.f32 %v117, %v102
    %v152 = vmul.f32 %v121, %v103
    %v153 = vmul.f32 %v125, %v104
    %v154 = vmul.f32 %v129, %v105
    %v155 = vmul.f32 %v133, %v106
    %v156 = vmul.f32 %v137, %v107
    %v157 = vmul.f32 %v141, %v108
    %158 = vst [vmem:[#allocation8] sm:$0xff] %v150
    %159 = vst [vmem:[#allocation8 + $0x8] sm:$0xff] %v151
    %160 = vst [vmem:[#allocation8 + $0x10] sm:$0xff] %v152
    %161 = vst [vmem:[#allocation8 + $0x18] sm:$0xff] %v153
    %162 = vst [vmem:[#allocation8 + $0x20] sm:$0xff] %v154
    %163 = vst [vmem:[#allocation8 + $0x28] sm:$0xff] %v155
    %164 = vst [vmem:[#allocation8 + $0x30] sm:$0xff] %v156
    %165 = vst [vmem:[#allocation8 + $0x38] sm:$0xff] %v157
    // Predicated region
    $region26: #{tpu_custom_call.1} parent=1 // pred_check
      _
    $region27: #{tpu_custom_call.1} parent=1 // pred_check_branch
      %167 = sbr.rel (0) target = $region29
    $region28: #{tpu_custom_call.1} parent=1 // pred_region
      %s169 = ssub.s32 1024, 1024
      %170 = vsyncadd [#allocation4], %s169
      %s172 = sshll.u32 [#allocation8], 4
      %s173 = int_to_ptr.vmem [resolvable:$true] %s172
      %175 = dma.vmem_to_hbm [thread:$0]  %s173, 1024, %s3, [#allocation4]
    $region29: #{tpu_custom_call.1} parent=1 // pred_fallthru
      _
    // Predicated region
    $region30: #{tpu_custom_call.1} parent=1 // pred_check
      _
    $region31: #{tpu_custom_call.1} parent=1 // pred_check_branch
      %177 = sbr.rel (0) target = $region33
    $region32: #{tpu_custom_call.1} parent=1 // pred_region
      %178 = dma.done [#allocation4], 1024
    $region33: #{tpu_custom_call.1} parent=1 // pred_fallthru
      _
    %179 = vsyncpa [#allocation3], 1
    %180 = vsyncpa [#allocation6], 1
    %181 = vsyncpa [#allocation4], 1

</llo_original>
